<compile_context>
chip_gen: v5e
topology: v5e:2x2
jax: 0.10.0
libtpu: 0.0.40
codegen_flags: <defaults>
</compile_context>

<pallas_src>
import functools
import math

import jax
import jax.numpy as jnp
from jax import lax
from jax.experimental import pallas as pl
from jax.experimental.pallas import tpu as pltpu


def _spatial_attn_kernel(x_ref, o_ref, *, inv_sqrt_f):
    # x_ref block: (1, N, T, F) ; o_ref block: (1, T, N, N)
    T = x_ref.shape[2]
    scale = jnp.float32(inv_sqrt_f)
    # Short unrolled loop over the timesteps held in this block; each iteration
    # is a 2-D MXU matmul contracting over F (no explicit transpose needed).
    for t in range(T):
        xt = x_ref[0, :, t, :]                               # (N, F), native dtype
        s = lax.dot_general(
            xt, xt,
            dimension_numbers=(((1,), (1,)), ((), ())),      # out[n,m]=sum_f x[n,f]x[m,f]
            preferred_element_type=jnp.float32,
        ) * scale                                            # (N, N) f32
        # numerically-stable softmax over the last axis (== F.softmax(dim=-1))
        s = s - jnp.max(s, axis=-1, keepdims=True)
        e = jnp.exp(s)
        denom = jnp.sum(e, axis=-1, keepdims=True)
        p = e * pl.reciprocal(denom, approx=True)
        o_ref[0, t] = p.astype(o_ref.dtype)
    # TODO(synk): dropout with p > 0 would need pltpu.prng_random_bits; the
    # module default p = 0.0 is the identity, so it is omitted here.


def spatial_attention_layer(x, dropout: float = 0.0):
    """x: (B, N, T, F) -> (B, T, N, N), matching the PyTorch module forward."""
    assert dropout == 0.0, "only the default p=0.0 (identity dropout) is implemented"
    B, N, T, F = x.shape

    itemsize = jnp.dtype(x.dtype).itemsize
    in_block = N * T * F * itemsize
    out_block = T * N * N * itemsize
    f32_intermediates = 4 * N * N * 4              # per-iteration softmax temporaries
    vmem_bytes = 2 * (in_block + out_block) + f32_intermediates + (4 << 20)
    # Raise the scoped VMEM default (16 MiB on v5e) so large (T, N, N) blocks
    # still double-buffer; cap at 64 MiB (physical VMEM per TensorCore on v7x).
    vmem_limit = int(min(max(vmem_bytes, 32 << 20), 64 << 20))

    kernel = functools.partial(_spatial_attn_kernel, inv_sqrt_f=1.0 / math.sqrt(F))

    out = pl.pallas_call(
        kernel,
        out_shape=jax.ShapeDtypeStruct((B, T, N, N), x.dtype),
        grid_spec=pltpu.PrefetchScalarGridSpec(
            num_scalar_prefetch=0,
            grid=(B,),
            # Last two block dims equal the full array dims -> legal block shapes.
            in_specs=[pl.BlockSpec((1, N, T, F), lambda b: (b, 0, 0, 0))],
            out_specs=pl.BlockSpec((1, T, N, N), lambda b: (b, 0, 0, 0)),
        ),
        compiler_params=pltpu.CompilerParams(
            dimension_semantics=("parallel",),
            vmem_limit_bytes=vmem_limit,
        ),
    )(x)
    # TODO(synk): for graphs where N is large but not a multiple of 128 (e.g. 307),
    # padding the output lane dim to the next multiple of 128 gives unmasked
    # full-lane stores; only worth it if downstream consumers accept the padding.
    return out


def _reference(x):
    B, N, T, F = x.shape
    xf = jnp.transpose(x, (0, 2, 1, 3)).reshape(B * T, N, F).astype(jnp.float32)
    s = jnp.einsum("bnf,bmf->bnm", xf, xf) / math.sqrt(F)
    s = jax.nn.softmax(s, axis=-1)
    return s.reshape(B, T, N, N)


if __name__ == "__main__":
    B, N, T, F = 2, 16, 8, 4
    key = jax.random.PRNGKey(0)
    x = jax.random.normal(key, (B, N, T, F), dtype=jnp.float32)

    out = jax.block_until_ready(spatial_attention_layer(x))
    ref = _reference(x)

    assert out.shape == (B, T, N, N), out.shape
    # approx reciprocal in the softmax denominator -> allow ~1e-3 relative slack
    assert jnp.allclose(out, ref.astype(out.dtype), atol=2e-3, rtol=2e-3), float(
        jnp.max(jnp.abs(out.astype(jnp.float32) - ref))
    )

    print("KERNEL_OK")
</pallas_src>

<mosaic_0001>
module attributes {stable_mosaic.version = 11 : i64} {
  func.func @_spatial_attn_kernel(%arg0: i32, %arg1: memref<1x16x8x4xf32, #tpu.memory_space<vmem>>, %arg2: memref<1x8x16x16xf32, #tpu.memory_space<vmem>>) attributes {dimension_semantics = [#tpu.dimension_semantics<parallel>], iteration_bounds = array<i64: 2>, scalar_prefetch = 0 : i64, scratch_operands = 0 : i64, tpu.core_type = #tpu.core_type<tc>, window_params = [{transform_indices = @transform_0, window_bounds = array<i64: 1, 16, 8, 4>}, {transform_indices = @transform_1, window_bounds = array<i64: 1, 8, 16, 16>}]} {
    %c0 = arith.constant 0 : index
    %c0_0 = arith.constant 0 : index
    %c0_1 = arith.constant 0 : index
    %c0_2 = arith.constant 0 : index
    %0 = vector.load %arg1[%c0, %c0_0, %c0_1, %c0_2] : memref<1x16x8x4xf32, #tpu.memory_space<vmem>>, vector<1x16x1x4xf32>
    %1 = vector.shape_cast %0 : vector<1x16x1x4xf32> to vector<16x4xf32>
    %cst = arith.constant dense<0.000000e+00> : vector<16x16xf32>
    %2 = tpu.matmul %1, %1, %cst {dimension_numbers = #tpu.dot_dimension_numbers<[1], [1], [0], [0], [0, 0, 1, 0], [], []>} : vector<16x4xf32>, vector<16x4xf32>, vector<16x16xf32> -> vector<16x16xf32>
    %cst_3 = arith.constant 5.000000e-01 : f32
    %3 = vector.broadcast %cst_3 : f32 to vector<16x16xf32>
    %4 = arith.mulf %2, %3 : vector<16x16xf32>
    %cst_4 = arith.constant dense<0xFF800000> : vector<16xf32>
    %5 = vector.multi_reduction <maximumf>, %4, %cst_4 [1] : vector<16x16xf32> to vector<16xf32>
    %6 = vector.shape_cast %5 : vector<16xf32> to vector<16x1xf32>
    %7 = vector.broadcast %6 : vector<16x1xf32> to vector<16x16xf32>
    %8 = arith.subf %4, %7 : vector<16x16xf32>
    %9 = math.exp %8 : vector<16x16xf32>
    %cst_5 = arith.constant dense<0.000000e+00> : vector<16xf32>
    %10 = vector.multi_reduction <add>, %9, %cst_5 [1] : vector<16x16xf32> to vector<16xf32>
    %11 = vector.shape_cast %10 : vector<16xf32> to vector<16x1xf32>
    %12 = tpu.reciprocal %11 {approx = true} : vector<16x1xf32> -> vector<16x1xf32>
    %13 = vector.broadcast %12 : vector<16x1xf32> to vector<16x16xf32>
    %14 = arith.mulf %9, %13 : vector<16x16xf32>
    %c0_6 = arith.constant 0 : index
    %c0_7 = arith.constant 0 : index
    %c0_8 = arith.constant 0 : index
    %c0_9 = arith.constant 0 : index
    %15 = vector.load %arg2[%c0_6, %c0_7, %c0_8, %c0_9] : memref<1x8x16x16xf32, #tpu.memory_space<vmem>>, vector<1x1x16x16xf32>
    %16 = vector.shape_cast %15 : vector<1x1x16x16xf32> to vector<16x16xf32>
    %17 = vector.shape_cast %14 : vector<16x16xf32> to vector<1x1x16x16xf32>
    tpu.vector_store %arg2[%c0_6, %c0_7, %c0_8, %c0_9], %17 {strides = array<i32>} : memref<1x8x16x16xf32, #tpu.memory_space<vmem>>, vector<1x1x16x16xf32>,
    %c0_10 = arith.constant 0 : index
    %c0_11 = arith.constant 0 : index
    %c1 = arith.constant 1 : index
    %c0_12 = arith.constant 0 : index
    %18 = vector.load %arg1[%c0_10, %c0_11, %c1, %c0_12] : memref<1x16x8x4xf32, #tpu.memory_space<vmem>>, vector<1x16x1x4xf32>
    %19 = vector.shape_cast %18 : vector<1x16x1x4xf32> to vector<16x4xf32>
    %cst_13 = arith.constant dense<0.000000e+00> : vector<16x16xf32>
    %20 = tpu.matmul %19, %19, %cst_13 {dimension_numbers = #tpu.dot_dimension_numbers<[1], [1], [0], [0], [0, 0, 1, 0], [], []>} : vector<16x4xf32>, vector<16x4xf32>, vector<16x16xf32> -> vector<16x16xf32>
    %cst_14 = arith.constant 5.000000e-01 : f32
    %21 = vector.broadcast %cst_14 : f32 to vector<16x16xf32>
    %22 = arith.mulf %20, %21 : vector<16x16xf32>
    %cst_15 = arith.constant dense<0xFF800000> : vector<16xf32>
    %23 = vector.multi_reduction <maximumf>, %22, %cst_15 [1] : vector<16x16xf32> to vector<16xf32>
    %24 = vector.shape_cast %23 : vector<16xf32> to vector<16x1xf32>
    %25 = vector.broadcast %24 : vector<16x1xf32> to vector<16x16xf32>
    %26 = arith.subf %22, %25 : vector<16x16xf32>
    %27 = math.exp %26 : vector<16x16xf32>
    %cst_16 = arith.constant dense<0.000000e+00> : vector<16xf32>
    %28 = vector.multi_reduction <add>, %27, %cst_16 [1] : vector<16x16xf32> to vector<16xf32>
    %29 = vector.shape_cast %28 : vector<16xf32> to vector<16x1xf32>
    %30 = tpu.reciprocal %29 {approx = true} : vector<16x1xf32> -> vector<16x1xf32>
    %31 = vector.broadcast %30 : vector<16x1xf32> to vector<16x16xf32>
    %32 = arith.mulf %27, %31 : vector<16x16xf32>
    %c0_17 = arith.constant 0 : index
    %c1_18 = arith.constant 1 : index
    %c0_19 = arith.constant 0 : index
    %c0_20 = arith.constant 0 : index
    %33 = vector.load %arg2[%c0_17, %c1_18, %c0_19, %c0_20] : memref<1x8x16x16xf32, #tpu.memory_space<vmem>>, vector<1x1x16x16xf32>
    %34 = vector.shape_cast %33 : vector<1x1x16x16xf32> to vector<16x16xf32>
    %35 = vector.shape_cast %32 : vector<16x16xf32> to vector<1x1x16x16xf32>
    tpu.vector_store %arg2[%c0_17, %c1_18, %c0_19, %c0_20], %35 {strides = array<i32>} : memref<1x8x16x16xf32, #tpu.memory_space<vmem>>, vector<1x1x16x16xf32>,
    %c0_21 = arith.constant 0 : index
    %c0_22 = arith.constant 0 : index
    %c2 = arith.constant 2 : index
    %c0_23 = arith.constant 0 : index
    %36 = vector.load %arg1[%c0_21, %c0_22, %c2, %c0_23] : memref<1x16x8x4xf32, #tpu.memory_space<vmem>>, vector<1x16x1x4xf32>
    %37 = vector.shape_cast %36 : vector<1x16x1x4xf32> to vector<16x4xf32>
    %cst_24 = arith.constant dense<0.000000e+00> : vector<16x16xf32>
    %38 = tpu.matmul %37, %37, %cst_24 {dimension_numbers = #tpu.dot_dimension_numbers<[1], [1], [0], [0], [0, 0, 1, 0], [], []>} : vector<16x4xf32>, vector<16x4xf32>, vector<16x16xf32> -> vector<16x16xf32>
    %cst_25 = arith.constant 5.000000e-01 : f32
    %39 = vector.broadcast %cst_25 : f32 to vector<16x16xf32>
    %40 = arith.mulf %38, %39 : vector<16x16xf32>
    %cst_26 = arith.constant dense<0xFF800000> : vector<16xf32>
    %41 = vector.multi_reduction <maximumf>, %40, %cst_26 [1] : vector<16x16xf32> to vector<16xf32>
    %42 = vector.shape_cast %41 : vector<16xf32> to vector<16x1xf32>
    %43 = vector.broadcast %42 : vector<16x1xf32> to vector<16x16xf32>
    %44 = arith.subf %40, %43 : vector<16x16xf32>
    %45 = math.exp %44 : vector<16x16xf32>
    %cst_27 = arith.constant dense<0.000000e+00> : vector<16xf32>
    %46 = vector.multi_reduction <add>, %45, %cst_27 [1] : vector<16x16xf32> to vector<16xf32>
    %47 = vector.shape_cast %46 : vector<16xf32> to vector<16x1xf32>
    %48 = tpu.reciprocal %47 {approx = true} : vector<16x1xf32> -> vector<16x1xf32>
    %49 = vector.broadcast %48 : vector<16x1xf32> to vector<16x16xf32>
    %50 = arith.mulf %45, %49 : vector<16x16xf32>
    %c0_28 = arith.constant 0 : index
    %c2_29 = arith.constant 2 : index
    %c0_30 = arith.constant 0 : index
    %c0_31 = arith.constant 0 : index
    %51 = vector.load %arg2[%c0_28, %c2_29, %c0_30, %c0_31] : memref<1x8x16x16xf32, #tpu.memory_space<vmem>>, vector<1x1x16x16xf32>
    %52 = vector.shape_cast %51 : vector<1x1x16x16xf32> to vector<16x16xf32>
    %53 = vector.shape_cast %50 : vector<16x16xf32> to vector<1x1x16x16xf32>
    tpu.vector_store %arg2[%c0_28, %c2_29, %c0_30, %c0_31], %53 {strides = array<i32>} : memref<1x8x16x16xf32, #tpu.memory_space<vmem>>, vector<1x1x16x16xf32>,
    %c0_32 = arith.constant 0 : index
    %c0_33 = arith.constant 0 : index
    %c3 = arith.constant 3 : index
    %c0_34 = arith.constant 0 : index
    %54 = vector.load %arg1[%c0_32, %c0_33, %c3, %c0_34] : memref<1x16x8x4xf32, #tpu.memory_space<vmem>>, vector<1x16x1x4xf32>
    %55 = vector.shape_cast %54 : vector<1x16x1x4xf32> to vector<16x4xf32>
    %cst_35 = arith.constant dense<0.000000e+00> : vector<16x16xf32>
    %56 = tpu.matmul %55, %55, %cst_35 {dimension_numbers = #tpu.dot_dimension_numbers<[1], [1], [0], [0], [0, 0, 1, 0], [], []>} : vector<16x4xf32>, vector<16x4xf32>, vector<16x16xf32> -> vector<16x16xf32>
    %cst_36 = arith.constant 5.000000e-01 : f32
    %57 = vector.broadcast %cst_36 : f32 to vector<16x16xf32>
    %58 = arith.mulf %56, %57 : vector<16x16xf32>
    %cst_37 = arith.constant dense<0xFF800000> : vector<16xf32>
    %59 = vector.multi_reduction <maximumf>, %58, %cst_37 [1] : vector<16x16xf32> to vector<16xf32>
    %60 = vector.shape_cast %59 : vector<16xf32> to vector<16x1xf32>
    %61 = vector.broadcast %60 : vector<16x1xf32> to vector<16x16xf32>
    %62 = arith.subf %58, %61 : vector<16x16xf32>
    %63 = math.exp %62 : vector<16x16xf32>
    %cst_38 = arith.constant dense<0.000000e+00> : vector<16xf32>
    %64 = vector.multi_reduction <add>, %63, %cst_38 [1] : vector<16x16xf32> to vector<16xf32>
    %65 = vector.shape_cast %64 : vector<16xf32> to vector<16x1xf32>
    %66 = tpu.reciprocal %65 {approx = true} : vector<16x1xf32> -> vector<16x1xf32>
    %67 = vector.broadcast %66 : vector<16x1xf32> to vector<16x16xf32>
    %68 = arith.mulf %63, %67 : vector<16x16xf32>
    %c0_39 = arith.constant 0 : index
    %c3_40 = arith.constant 3 : index
    %c0_41 = arith.constant 0 : index
    %c0_42 = arith.constant 0 : index
    %69 = vector.load %arg2[%c0_39, %c3_40, %c0_41, %c0_42] : memref<1x8x16x16xf32, #tpu.memory_space<vmem>>, vector<1x1x16x16xf32>
    %70 = vector.shape_cast %69 : vector<1x1x16x16xf32> to vector<16x16xf32>
    %71 = vector.shape_cast %68 : vector<16x16xf32> to vector<1x1x16x16xf32>
    tpu.vector_store %arg2[%c0_39, %c3_40, %c0_41, %c0_42], %71 {strides = array<i32>} : memref<1x8x16x16xf32, #tpu.memory_space<vmem>>, vector<1x1x16x16xf32>,
    %c0_43 = arith.constant 0 : index
    %c0_44 = arith.constant 0 : index
    %c4 = arith.constant 4 : index
    %c0_45 = arith.constant 0 : index
    %72 = vector.load %arg1[%c0_43, %c0_44, %c4, %c0_45] : memref<1x16x8x4xf32, #tpu.memory_space<vmem>>, vector<1x16x1x4xf32>
    %73 = vector.shape_cast %72 : vector<1x16x1x4xf32> to vector<16x4xf32>
    %cst_46 = arith.constant dense<0.000000e+00> : vector<16x16xf32>
    %74 = tpu.matmul %73, %73, %cst_46 {dimension_numbers = #tpu.dot_dimension_numbers<[1], [1], [0], [0], [0, 0, 1, 0], [], []>} : vector<16x4xf32>, vector<16x4xf32>, vector<16x16xf32> -> vector<16x16xf32>
    %cst_47 = arith.constant 5.000000e-01 : f32
    %75 = vector.broadcast %cst_47 : f32 to vector<16x16xf32>
    %76 = arith.mulf %74, %75 : vector<16x16xf32>
    %cst_48 = arith.constant dense<0xFF800000> : vector<16xf32>
    %77 = vector.multi_reduction <maximumf>, %76, %cst_48 [1] : vector<16x16xf32> to vector<16xf32>
    %78 = vector.shape_cast %77 : vector<16xf32> to vector<16x1xf32>
    %79 = vector.broadcast %78 : vector<16x1xf32> to vector<16x16xf32>
    %80 = arith.subf %76, %79 : vector<16x16xf32>
    %81 = math.exp %80 : vector<16x16xf32>
    %cst_49 = arith.constant dense<0.000000e+00> : vector<16xf32>
    %82 = vector.multi_reduction <add>, %81, %cst_49 [1] : vector<16x16xf32> to vector<16xf32>
    %83 = vector.shape_cast %82 : vector<16xf32> to vector<16x1xf32>
    %84 = tpu.reciprocal %83 {approx = true} : vector<16x1xf32> -> vector<16x1xf32>
    %85 = vector.broadcast %84 : vector<16x1xf32> to vector<16x16xf32>
    %86 = arith.mulf %81, %85 : vector<16x16xf32>
    %c0_50 = arith.constant 0 : index
    %c4_51 = arith.constant 4 : index
    %c0_52 = arith.constant 0 : index
    %c0_53 = arith.constant 0 : index
    %87 = vector.load %arg2[%c0_50, %c4_51, %c0_52, %c0_53] : memref<1x8x16x16xf32, #tpu.memory_space<vmem>>, vector<1x1x16x16xf32>
    %88 = vector.shape_cast %87 : vector<1x1x16x16xf32> to vector<16x16xf32>
    %89 = vector.shape_cast %86 : vector<16x16xf32> to vector<1x1x16x16xf32>
    tpu.vector_store %arg2[%c0_50, %c4_51, %c0_52, %c0_53], %89 {strides = array<i32>} : memref<1x8x16x16xf32, #tpu.memory_space<vmem>>, vector<1x1x16x16xf32>,
    %c0_54 = arith.constant 0 : index
    %c0_55 = arith.constant 0 : index
    %c5 = arith.constant 5 : index
    %c0_56 = arith.constant 0 : index
    %90 = vector.load %arg1[%c0_54, %c0_55, %c5, %c0_56] : memref<1x16x8x4xf32, #tpu.memory_space<vmem>>, vector<1x16x1x4xf32>
    %91 = vector.shape_cast %90 : vector<1x16x1x4xf32> to vector<16x4xf32>
    %cst_57 = arith.constant dense<0.000000e+00> : vector<16x16xf32>
    %92 = tpu.matmul %91, %91, %cst_57 {dimension_numbers = #tpu.dot_dimension_numbers<[1], [1], [0], [0], [0, 0, 1, 0], [], []>} : vector<16x4xf32>, vector<16x4xf32>, vector<16x16xf32> -> vector<16x16xf32>
    %cst_58 = arith.constant 5.000000e-01 : f32
    %93 = vector.broadcast %cst_58 : f32 to vector<16x16xf32>
    %94 = arith.mulf %92, %93 : vector<16x16xf32>
    %cst_59 = arith.constant dense<0xFF800000> : vector<16xf32>
    %95 = vector.multi_reduction <maximumf>, %94, %cst_59 [1] : vector<16x16xf32> to vector<16xf32>
    %96 = vector.shape_cast %95 : vector<16xf32> to vector<16x1xf32>
    %97 = vector.broadcast %96 : vector<16x1xf32> to vector<16x16xf32>
    %98 = arith.subf %94, %97 : vector<16x16xf32>
    %99 = math.exp %98 : vector<16x16xf32>
    %cst_60 = arith.constant dense<0.000000e+00> : vector<16xf32>
    %100 = vector.multi_reduction <add>, %99, %cst_60 [1] : vector<16x16xf32> to vector<16xf32>
    %101 = vector.shape_cast %100 : vector<16xf32> to vector<16x1xf32>
    %102 = tpu.reciprocal %101 {approx = true} : vector<16x1xf32> -> vector<16x1xf32>
    %103 = vector.broadcast %102 : vector<16x1xf32> to vector<16x16xf32>
    %104 = arith.mulf %99, %103 : vector<16x16xf32>
    %c0_61 = arith.constant 0 : index
    %c5_62 = arith.constant 5 : index
    %c0_63 = arith.constant 0 : index
    %c0_64 = arith.constant 0 : index
    %105 = vector.load %arg2[%c0_61, %c5_62, %c0_63, %c0_64] : memref<1x8x16x16xf32, #tpu.memory_space<vmem>>, vector<1x1x16x16xf32>
    %106 = vector.shape_cast %105 : vector<1x1x16x16xf32> to vector<16x16xf32>
    %107 = vector.shape_cast %104 : vector<16x16xf32> to vector<1x1x16x16xf32>
    tpu.vector_store %arg2[%c0_61, %c5_62, %c0_63, %c0_64], %107 {strides = array<i32>} : memref<1x8x16x16xf32, #tpu.memory_space<vmem>>, vector<1x1x16x16xf32>,
    %c0_65 = arith.constant 0 : index
    %c0_66 = arith.constant 0 : index
    %c6 = arith.constant 6 : index
    %c0_67 = arith.constant 0 : index
    %108 = vector.load %arg1[%c0_65, %c0_66, %c6, %c0_67] : memref<1x16x8x4xf32, #tpu.memory_space<vmem>>, vector<1x16x1x4xf32>
    %109 = vector.shape_cast %108 : vector<1x16x1x4xf32> to vector<16x4xf32>
    %cst_68 = arith.constant dense<0.000000e+00> : vector<16x16xf32>
    %110 = tpu.matmul %109, %109, %cst_68 {dimension_numbers = #tpu.dot_dimension_numbers<[1], [1], [0], [0], [0, 0, 1, 0], [], []>} : vector<16x4xf32>, vector<16x4xf32>, vector<16x16xf32> -> vector<16x16xf32>
    %cst_69 = arith.constant 5.000000e-01 : f32
    %111 = vector.broadcast %cst_69 : f32 to vector<16x16xf32>
    %112 = arith.mulf %110, %111 : vector<16x16xf32>
    %cst_70 = arith.constant dense<0xFF800000> : vector<16xf32>
    %113 = vector.multi_reduction <maximumf>, %112, %cst_70 [1] : vector<16x16xf32> to vector<16xf32>
    %114 = vector.shape_cast %113 : vector<16xf32> to vector<16x1xf32>
    %115 = vector.broadcast %114 : vector<16x1xf32> to vector<16x16xf32>
    %116 = arith.subf %112, %115 : vector<16x16xf32>
    %117 = math.exp %116 : vector<16x16xf32>
    %cst_71 = arith.constant dense<0.000000e+00> : vector<16xf32>
    %118 = vector.multi_reduction <add>, %117, %cst_71 [1] : vector<16x16xf32> to vector<16xf32>
    %119 = vector.shape_cast %118 : vector<16xf32> to vector<16x1xf32>
    %120 = tpu.reciprocal %119 {approx = true} : vector<16x1xf32> -> vector<16x1xf32>
    %121 = vector.broadcast %120 : vector<16x1xf32> to vector<16x16xf32>
    %122 = arith.mulf %117, %121 : vector<16x16xf32>
    %c0_72 = arith.constant 0 : index
    %c6_73 = arith.constant 6 : index
    %c0_74 = arith.constant 0 : index
    %c0_75 = arith.constant 0 : index
    %123 = vector.load %arg2[%c0_72, %c6_73, %c0_74, %c0_75] : memref<1x8x16x16xf32, #tpu.memory_space<vmem>>, vector<1x1x16x16xf32>
    %124 = vector.shape_cast %123 : vector<1x1x16x16xf32> to vector<16x16xf32>
    %125 = vector.shape_cast %122 : vector<16x16xf32> to vector<1x1x16x16xf32>
    tpu.vector_store %arg2[%c0_72, %c6_73, %c0_74, %c0_75], %125 {strides = array<i32>} : memref<1x8x16x16xf32, #tpu.memory_space<vmem>>, vector<1x1x16x16xf32>,
    %c0_76 = arith.constant 0 : index
    %c0_77 = arith.constant 0 : index
    %c7 = arith.constant 7 : index
    %c0_78 = arith.constant 0 : index
    %126 = vector.load %arg1[%c0_76, %c0_77, %c7, %c0_78] : memref<1x16x8x4xf32, #tpu.memory_space<vmem>>, vector<1x16x1x4xf32>
    %127 = vector.shape_cast %126 : vector<1x16x1x4xf32> to vector<16x4xf32>
    %cst_79 = arith.constant dense<0.000000e+00> : vector<16x16xf32>
    %128 = tpu.matmul %127, %127, %cst_79 {dimension_numbers = #tpu.dot_dimension_numbers<[1], [1], [0], [0], [0, 0, 1, 0], [], []>} : vector<16x4xf32>, vector<16x4xf32>, vector<16x16xf32> -> vector<16x16xf32>
    %cst_80 = arith.constant 5.000000e-01 : f32
    %129 = vector.broadcast %cst_80 : f32 to vector<16x16xf32>
    %130 = arith.mulf %128, %129 : vector<16x16xf32>
    %cst_81 = arith.constant dense<0xFF800000> : vector<16xf32>
    %131 = vector.multi_reduction <maximumf>, %130, %cst_81 [1] : vector<16x16xf32> to vector<16xf32>
    %132 = vector.shape_cast %131 : vector<16xf32> to vector<16x1xf32>
    %133 = vector.broadcast %132 : vector<16x1xf32> to vector<16x16xf32>
    %134 = arith.subf %130, %133 : vector<16x16xf32>
    %135 = math.exp %134 : vector<16x16xf32>
    %cst_82 = arith.constant dense<0.000000e+00> : vector<16xf32>
    %136 = vector.multi_reduction <add>, %135, %cst_82 [1] : vector<16x16xf32> to vector<16xf32>
    %137 = vector.shape_cast %136 : vector<16xf32> to vector<16x1xf32>
    %138 = tpu.reciprocal %137 {approx = true} : vector<16x1xf32> -> vector<16x1xf32>
    %139 = vector.broadcast %138 : vector<16x1xf32> to vector<16x16xf32>
    %140 = arith.mulf %135, %139 : vector<16x16xf32>
    %c0_83 = arith.constant 0 : index
    %c7_84 = arith.constant 7 : index
    %c0_85 = arith.constant 0 : index
    %c0_86 = arith.constant 0 : index
    %141 = vector.load %arg2[%c0_83, %c7_84, %c0_85, %c0_86] : memref<1x8x16x16xf32, #tpu.memory_space<vmem>>, vector<1x1x16x16xf32>
    %142 = vector.shape_cast %141 : vector<1x1x16x16xf32> to vector<16x16xf32>
    %143 = vector.shape_cast %140 : vector<16x16xf32> to vector<1x1x16x16xf32>
    tpu.vector_store %arg2[%c0_83, %c7_84, %c0_85, %c0_86], %143 {strides = array<i32>} : memref<1x8x16x16xf32, #tpu.memory_space<vmem>>, vector<1x1x16x16xf32>,
    return
  }
  func.func @transform_0(%arg0: i32) -> (i32, i32, i32, i32) {
    %c0_i32 = arith.constant 0 : i32
    %c0_i32_0 = arith.constant 0 : i32
    %c0_i32_1 = arith.constant 0 : i32
    %c0_i32_2 = arith.constant 0 : i32
    return %arg0, %c0_i32, %c0_i32_0, %c0_i32_1 : i32, i32, i32, i32
  }
  func.func @transform_1(%arg0: i32) -> (i32, i32, i32, i32) {
    %c0_i32 = arith.constant 0 : i32
    %c0_i32_0 = arith.constant 0 : i32
    %c0_i32_1 = arith.constant 0 : i32
    %c0_i32_2 = arith.constant 0 : i32
    return %arg0, %c0_i32, %c0_i32_0, %c0_i32_1 : i32, i32, i32, i32
  }
}

</mosaic_0001>

<llo_original>
// kernel: tpu_custom_call.1
$region0: #{tpu_custom_call.1}
  #allocation0 [shape = 'u32[]', space=smem, size = 0x4, offset = 0x4, fixed_abs, tag = 'smem constant byte address 0x4 - core index']
  #allocation1 [shape = 'u32[72,128]{1,0:T(1,128)}', space=vmem, size = 0x9000, scoped, tag = 'internal scratch']
  %s0 = inlined_call_operand.vmem [shape: f32[2,16,8,4], index: 0, kind: input, shape index: {}]
  %s1 = inlined_call_operand.hbm [shape: f32[2,8,16,16], index: 1, kind: output, shape index: {}]
  %s2 = sld [smem:[#allocation0]]
  $region37: #{tpu_custom_call.1} parent=0
    _
  %s4 = ssub.s32 1, %s2
  %s5 = scalar_select 0, %s4, %s2
  $region1: #{tpu_custom_call.1} parent=0
    #allocation2 [shape = 'u8[131072]{0}', space=vmem, size = 0x20000, scoped, tag = 'output window, operand 0']
    #allocation3 [shape = 's32[2]{0}', space=sflag, size = 0x8, scoped, tag = 'scoped memory for tpu_custom_call.1']
    %6 = vsyncpa [#allocation3], 0
    %s7 = scalar_lea.sflag [#allocation3], 1
    %8 = vsyncpa %s7, 0
    loop: start=0, step=1, limit=4
    $region2: #{tpu_custom_call.1} parent=1 // loop_pre_header
      _
    $region3: #{tpu_custom_call.1} parent=1 // loop_header
      %s10 = sphi 0, %s14
      %p11 = scmp.ge.s32.totalorder %s10, 4
      %s20 = sphi 0, %s22
      %s23 = sphi 0, %s20
      %s24 = sphi 0, %s23
      %s40 = sphi 0, %s24
      %s46 = sphi 0, %s48
      %s49 = sphi 0, %s46
      %s50 = sphi 0, %s49
      %s66 = sphi 0, %s50
    $region4: #{tpu_custom_call.1} parent=1 // loop_header_branch
      %13 = sbr.rel (%p11) target = $region8
    $region5: #{tpu_custom_call.1} parent=1 // loop_body
      %s15 = ssub.s32 %s10, 1
      %s16 = ssub.s32 %s10, 2
      %s17 = sadd.s32 %s10, 1
      %s18 = ssub.s32 %s10, %s17
      %p19 = scmp.eq.s32.totalorder %s18, 0
      %s21 = sadd.s32 %s20, 1
      %s22 = scalar_select %p19, %s20, %s21
      %p25 = pneg %p19
      %p26 = scmp.eq.s32.totalorder %s10, 1
      %p27 = por %p25, %p26
      %p28 = scmp.ne.s32.totalorder %s20, %s23
      %p29 = scmp.eq.s32.totalorder %s10, 0
      %p30 = por %p28, %p29
      %p31 = scmp.ne.s32.totalorder %s20, %s23
      %p32 = scmp.eq.s32.totalorder %s15, 1
      %p33 = por %p31, %p32
      %p34 = scmp.ne.s32.totalorder %s23, %s24
      %p35 = scmp.eq.s32.totalorder %s15, 0
      %p36 = por %p34, %p35
      %p37 = scmp.ne.s32.totalorder %s23, %s24
      %p38 = scmp.eq.s32.totalorder %s16, 1
      %p39 = por %p37, %p38
      %p41 = scmp.ne.s32.totalorder %s24, %s40
      %p42 = scmp.eq.s32.totalorder %s16, 0
      %p43 = por %p41, %p42
      %s44 = ssub.s32 %s10, %s17
      %p45 = scmp.eq.s32.totalorder %s44, 0
      %s47 = sadd.s32 %s46, 1
      %s48 = scalar_select %p45, %s46, %s47
      %p51 = pneg %p45
      %p52 = scmp.eq.s32.totalorder %s10, 1
      %p53 = por %p51, %p52
      %p54 = scmp.ne.s32.totalorder %s46, %s49
      %p55 = scmp.eq.s32.totalorder %s10, 0
      %p56 = por %p54, %p55
      %p57 = scmp.ne.s32.totalorder %s46, %s49
      %p58 = scmp.eq.s32.totalorder %s15, 1
      %p59 = por %p57, %p58
      %p60 = scmp.ne.s32.totalorder %s49, %s50
      %p61 = scmp.eq.s32.totalorder %s15, 0
      %p62 = por %p60, %p61
      %p63 = scmp.ne.s32.totalorder %s49, %s50
      %p64 = scmp.eq.s32.totalorder %s16, 1
      %p65 = por %p63, %p64
      %p67 = scmp.ne.s32.totalorder %s50, %s66
      %p68 = scmp.eq.s32.totalorder %s16, 0
      %p69 = por %p67, %p68
      %p70 = scmp.le.s32.totalorder 1, %s10
      %p71 = scmp.lt.s32.totalorder %s10, 3
      %p72 = pnand %p70, %p71
      %p73 = pneg %p72
      // Predicated region
      $region9: #{tpu_custom_call.1} parent=5 // pred_check
        _
      $region10: #{tpu_custom_call.1} parent=5 // pred_check_branch
        %75 = sbr.rel (%p72) target = $region12
      $region11: #{tpu_custom_call.1} parent=5 // pred_region
        %s76 = ssub.s32 %s10, 1
      $region12: #{tpu_custom_call.1} parent=5 // pred_fallthru
        _
      %p77 = scmp.lt.s32.totalorder %s10, 2
      // Predicated region
      $region13: #{tpu_custom_call.1} parent=5 // pred_check
        %p78 = pneg %p77
      $region14: #{tpu_custom_call.1} parent=5 // pred_check_branch
        %80 = sbr.rel (%p78) target = $region16
      $region15: #{tpu_custom_call.1} parent=5 // pred_region
        // Predicated region
        $region17: #{tpu_custom_call.1} parent=15 // pred_check
          %p81 = pneg %p30
        $region18: #{tpu_custom_call.1} parent=15 // pred_check_branch
          %83 = sbr.rel (%p81) target = $region20
        $region19: #{tpu_custom_call.1} parent=15 // pred_region
          %p84 = scmp.lt.s32.totalorder %s10, 1
          %s85 = scalar_select %p84, %s10, 1
          %s86 = smul.addr %s85, 16
          %s87 = smul.addr %s86, 8
          %s88 = scalar_lea.vmem %s0, %s87
        $region20: #{tpu_custom_call.1} parent=15 // pred_fallthru
          _
      $region16: #{tpu_custom_call.1} parent=5 // pred_fallthru
        _
      %p89 = scmp.le.s32.totalorder 1, %s10
      %p90 = scmp.lt.s32.totalorder %s10, 3
      %p91 = pnand %p89, %p90
      %p92 = pneg %p91
      // Predicated region
      $region21: #{tpu_custom_call.1} parent=5 // pred_check
        _
      $region22: #{tpu_custom_call.1} parent=5 // pred_check_branch
        %94 = sbr.rel (%p91) target = $region24
      $region23: #{tpu_custom_call.1} parent=5 // pred_region
        %s95 = ssub.s32 %s10, 1
        %p96 = scmp.lt.s32.totalorder %s15, 1
        %s97 = scalar_select %p96, %s15, 1
        %s98 = smul.addr %s97, 16
        %s99 = smul.addr %s98, 8
        %s100 = scalar_lea.vmem %s0, %s99
        %p101 = pneg %p36
        %p102 = pneg %p33
        %p103 = pneg %p62
        %p104 = pneg %p59
        %s105 = sand.u32 %s49, 1
        %s106 = scalar_lea.sflag [#allocation3], %s105
        %s107 = sand.u32 %s49, 1
        %s108 = smul.addr %s107, 128
        %s109 = scalar_lea.vmem [#allocation2], %s108
        %p110 = scmp.lt.s32.totalorder %s15, 1
        %s111 = scalar_select %p110, %s15, 1
        %s112 = smul.addr %s111, 16
        %s113 = smul.addr %s112, 8
        %s114 = scalar_lea.vmem %s0, %s113
        %v115 = vld [vmem:[%s114] sm:$0x1]
        %v116 = vld [vmem:[%s114 + $0x8] sm:$0x1]
        %v117 = vld [vmem:[%s114 + $0x10] sm:$0x1]
        %v118 = vld [vmem:[%s114 + $0x18] sm:$0x1]
        %v119 = vld [vmem:[%s114 + $0x20] sm:$0x1]
        %v120 = vld [vmem:[%s114 + $0x28] sm:$0x1]
        %v121 = vld [vmem:[%s114 + $0x30] sm:$0x1]
        %v122 = vld [vmem:[%s114 + $0x38] sm:$0x1]
        %v123 = vld [vmem:[%s114 + $0x40] sm:$0x1]
        %v124 = vld [vmem:[%s114 + $0x48] sm:$0x1]
        %v125 = vld [vmem:[%s114 + $0x50] sm:$0x1]
        %v126 = vld [vmem:[%s114 + $0x58] sm:$0x1]
        %v127 = vld [vmem:[%s114 + $0x60] sm:$0x1]
        %v128 = vld [vmem:[%s114 + $0x68] sm:$0x1]
        %v129 = vld [vmem:[%s114 + $0x70] sm:$0x1]
        %v130 = vld [vmem:[%s114 + $0x78] sm:$0x1]
        %v147 = vrot.slane %v116, 7
        %vm148 = vcmask 1041409
        %v149 = vsel %vm148, %v147, %v115
        %v150 = vrot.slane %v117, 6
        %vm151 = vcmask 1042434
        %v152 = vsel %vm151, %v150, %v149
        %v153 = vrot.slane %v118, 5
        %vm154 = vcmask 1043459
        %v155 = vsel %vm154, %v153, %v152
        %v156 = vrot.slane %v119, 4
        %vm157 = vcmask 1044484
        %v158 = vsel %vm157, %v156, %v155
        %v159 = vrot.slane %v120, 3
        %vm160 = vcmask 1045509
        %v161 = vsel %vm160, %v159, %v158
        %v162 = vrot.slane %v121, 2
        %vm163 = vcmask 1046534
        %v164 = vsel %vm163, %v162, %v161
        %v165 = vrot.slane %v122, 1
        %vm166 = vcmask 1047559
        %v167 = vsel %vm166, %v165, %v164
        %v168 = vrot.slane %v124, 7
        %v169 = vsel %vm148, %v168, %v123
        %v170 = vrot.slane %v125, 6
        %v171 = vsel %vm151, %v170, %v169
        %v172 = vrot.slane %v126, 5
        %v173 = vsel %vm154, %v172, %v171
        %v174 = vrot.slane %v127, 4
        %v175 = vsel %vm157, %v174, %v173
        %v176 = vrot.slane %v128, 3
        %v177 = vsel %vm160, %v176, %v175
        %v178 = vrot.slane %v129, 2
        %v179 = vsel %vm163, %v178, %v177
        %v180 = vrot.slane %v130, 1
        %v181 = vsel %vm166, %v180, %v179
        %vm182 = vcmask 31744
        %v183 = vsel %vm182, %v167, 0
        %v185 = vsel %vm182, %v181, 0
        %187 = vmatpush.xpose.msra.mxu0 0.0
        %188 = vmatpush.xpose.msra.mxu0 0.0
        %189 = vmatpush.xpose.msra.mxu0 0.0
        %190 = vmatpush.xpose.msra.mxu0 0.0
        %191 = vmatpush.xpose.msra.mxu0 0.0
        %192 = vmatpush.xpose.msra.mxu0 0.0
        %193 = vmatpush.xpose.msra.mxu0 0.0
        %194 = vmatpush.xpose.msra.mxu0 0.0
        %195 = vmatpush.xpose.msra.mxu0 0.0
        %196 = vmatpush.xpose.msra.mxu0 0.0
        %197 = vmatpush.xpose.msra.mxu0 0.0
        %198 = vmatpush.xpose.msra.mxu0 0.0
        %199 = vmatpush.xpose.msra.mxu0 0.0
        %200 = vmatpush.xpose.msra.mxu0 0.0
        %201 = vmatpush.xpose.msra.mxu0 %v185
        %202 = vmatpush.xpose.msra.mxu0 %v183
        %203 = vmatmul.f32.gmra.mxu0 %v183
        %v204 = vpop.f32.mrf.mxu0
        %v205 = vadd.f32 0.0, %v204
        %206 = vmatmul.f32.gmra.mxu0 %v185
        %v207 = vpop.f32.mrf.mxu0
        %v208 = vadd.f32 0.0, %v207
        %209 = vdwg.mxu0
        %v210 = vmul.f32 %v205, 0.5
        %v211 = vmul.f32 %v208, 0.5
        %vm212 = vcmask 130048
        %v213 = vsel %vm212, %v210, -inf
        %214 = vmax.xlane.f32.xlu0 %v213
        %v215 = vpop.xlane.xlu0 %214
        %v216 = vsel %vm212, %v211, -inf
        %217 = vmax.xlane.f32.xlu0 %v216
        %v218 = vpop.xlane.xlu0 %217
        %v219 = vsub.f32 %v210, %v215
        %v220 = vsub.f32 %v211, %v218
        %v221 = vmul.f32 %v219, 1.442695
        %v222 = vpow.pop %v221
        %v223 = vmul.f32 %v220, 1.442695
        %v224 = vpow.pop %v223
        %v225 = vsel %vm212, %v222, 0.0
        %226 = vadd.xlane.f32.xlu0 %v225
        %v227 = vpop.xlane.xlu0 %226
        %v228 = vsel %vm212, %v224, 0.0
        %229 = vadd.xlane.f32.xlu0 %v228
        %v230 = vpop.xlane.xlu0 %229
        %v231 = vrcp.pop %v227
        %v232 = vrcp.pop %v230
        %v233 = vmul.f32 %v222, %v231
        %v234 = vmul.f32 %v224, %v232
        %235 = vst.msk [vmem:[%s109] sm:$0xff] %vm212, %v233
        %236 = vst.msk [vmem:[%s109 + $0x8] sm:$0xff] %vm212, %v234
        %v237 = vld [vmem:[%s114 + $0x1] sm:$0x1]
        %v238 = vld [vmem:[%s114 + $0x9] sm:$0x1]
        %v239 = vld [vmem:[%s114 + $0x11] sm:$0x1]
        %v240 = vld [vmem:[%s114 + $0x19] sm:$0x1]
        %v241 = vld [vmem:[%s114 + $0x21] sm:$0x1]
        %v242 = vld [vmem:[%s114 + $0x29] sm:$0x1]
        %v243 = vld [vmem:[%s114 + $0x31] sm:$0x1]
        %v244 = vld [vmem:[%s114 + $0x39] sm:$0x1]
        %v245 = vld [vmem:[%s114 + $0x41] sm:$0x1]
        %v246 = vld [vmem:[%s114 + $0x49] sm:$0x1]
        %v247 = vld [vmem:[%s114 + $0x51] sm:$0x1]
        %v248 = vld [vmem:[%s114 + $0x59] sm:$0x1]
        %v249 = vld [vmem:[%s114 + $0x61] sm:$0x1]
        %v250 = vld [vmem:[%s114 + $0x69] sm:$0x1]
        %v251 = vld [vmem:[%s114 + $0x71] sm:$0x1]
        %v252 = vld [vmem:[%s114 + $0x79] sm:$0x1]
        %v269 = vrot.slane %v238, 7
        %v270 = vsel %vm148, %v269, %v237
        %v271 = vrot.slane %v239, 6
        %v272 = vsel %vm151, %v271, %v270
        %v273 = vrot.slane %v240, 5
        %v274 = vsel %vm154, %v273, %v272
        %v275 = vrot.slane %v241, 4
        %v276 = vsel %vm157, %v275, %v274
        %v277 = vrot.slane %v242, 3
        %v278 = vsel %vm160, %v277, %v276
        %v279 = vrot.slane %v243, 2
        %v280 = vsel %vm163, %v279, %v278
        %v281 = vrot.slane %v244, 1
        %v282 = vsel %vm166, %v281, %v280
        %v283 = vrot.slane %v246, 7
        %v284 = vsel %vm148, %v283, %v245
        %v285 = vrot.slane %v247, 6
        %v286 = vsel %vm151, %v285, %v284
        %v287 = vrot.slane %v248, 5
        %v288 = vsel %vm154, %v287, %v286
        %v289 = vrot.slane %v249, 4
        %v290 = vsel %vm157, %v289, %v288
        %v291 = vrot.slane %v250, 3
        %v292 = vsel %vm160, %v291, %v290
        %v293 = vrot.slane %v251, 2
        %v294 = vsel %vm163, %v293, %v292
        %v295 = vrot.slane %v252, 1
        %v296 = vsel %vm166, %v295, %v294
        %v297 = vsel %vm182, %v282, 0
        %v299 = vsel %vm182, %v296, 0
        %301 = vmatpush.xpose.msra.mxu0 0.0
        %302 = vmatpush.xpose.msra.mxu0 0.0
        %303 = vmatpush.xpose.msra.mxu0 0.0
        %304 = vmatpush.xpose.msra.mxu0 0.0
        %305 = vmatpush.xpose.msra.mxu0 0.0
        %306 = vmatpush.xpose.msra.mxu0 0.0
        %307 = vmatpush.xpose.msra.mxu0 0.0
        %308 = vmatpush.xpose.msra.mxu0 0.0
        %309 = vmatpush.xpose.msra.mxu0 0.0
        %310 = vmatpush.xpose.msra.mxu0 0.0
        %311 = vmatpush.xpose.msra.mxu0 0.0
        %312 = vmatpush.xpose.msra.mxu0 0.0
        %313 = vmatpush.xpose.msra.mxu0 0.0
        %314 = vmatpush.xpose.msra.mxu0 0.0
        %315 = vmatpush.xpose.msra.mxu0 %v299
        %316 = vmatpush.xpose.msra.mxu0 %v297
        %317 = vmatmul.f32.gmra.mxu0 %v297
        %v318 = vpop.f32.mrf.mxu0
        %v319 = vadd.f32 0.0, %v318
        %320 = vmatmul.f32.gmra.mxu0 %v299
        %v321 = vpop.f32.mrf.mxu0
        %v322 = vadd.f32 0.0, %v321
        %323 = vdwg.mxu0
        %v324 = vmul.f32 %v319, 0.5
        %v325 = vmul.f32 %v322, 0.5
        %v326 = vsel %vm212, %v324, -inf
        %327 = vmax.xlane.f32.xlu0 %v326
        %v328 = vpop.xlane.xlu0 %327
        %v329 = vsel %vm212, %v325, -inf
        %330 = vmax.xlane.f32.xlu0 %v329
        %v331 = vpop.xlane.xlu0 %330
        %v332 = vsub.f32 %v324, %v328
        %v333 = vsub.f32 %v325, %v331
        %v334 = vmul.f32 %v332, 1.442695
        %v335 = vpow.pop %v334
        %v336 = vmul.f32 %v333, 1.442695
        %v337 = vpow.pop %v336
        %v338 = vsel %vm212, %v335, 0.0
        %339 = vadd.xlane.f32.xlu0 %v338
        %v340 = vpop.xlane.xlu0 %339
        %v341 = vsel %vm212, %v337, 0.0
        %342 = vadd.xlane.f32.xlu0 %v341
        %v343 = vpop.xlane.xlu0 %342
        %v344 = vrcp.pop %v340
        %v345 = vrcp.pop %v343
        %v346 = vmul.f32 %v335, %v344
        %v347 = vmul.f32 %v337, %v345
        %s348 = scalar_lea.vmem %s109, 16 [#allocation2]
        %349 = vst.msk [vmem:[%s348] sm:$0xff] %vm212, %v346
        %350 = vst.msk [vmem:[%s348 + $0x8] sm:$0xff] %vm212, %v347
        %v351 = vld [vmem:[%s114 + $0x2] sm:$0x1]
        %v352 = vld [vmem:[%s114 + $0xa] sm:$0x1]
        %v353 = vld [vmem:[%s114 + $0x12] sm:$0x1]
        %v354 = vld [vmem:[%s114 + $0x1a] sm:$0x1]
        %v355 = vld [vmem:[%s114 + $0x22] sm:$0x1]
        %v356 = vld [vmem:[%s114 + $0x2a] sm:$0x1]
        %v357 = vld [vmem:[%s114 + $0x32] sm:$0x1]
        %v358 = vld [vmem:[%s114 + $0x3a] sm:$0x1]
        %v359 = vld [vmem:[%s114 + $0x42] sm:$0x1]
        %v360 = vld [vmem:[%s114 + $0x4a] sm:$0x1]
        %v361 = vld [vmem:[%s114 + $0x52] sm:$0x1]
        %v362 = vld [vmem:[%s114 + $0x5a] sm:$0x1]
        %v363 = vld [vmem:[%s114 + $0x62] sm:$0x1]
        %v364 = vld [vmem:[%s114 + $0x6a] sm:$0x1]
        %v365 = vld [vmem:[%s114 + $0x72] sm:$0x1]
        %v366 = vld [vmem:[%s114 + $0x7a] sm:$0x1]
        %v383 = vrot.slane %v352, 7
        %v384 = vsel %vm148, %v383, %v351
        %v385 = vrot.slane %v353, 6
        %v386 = vsel %vm151, %v385, %v384
        %v387 = vrot.slane %v354, 5
        %v388 = vsel %vm154, %v387, %v386
        %v389 = vrot.slane %v355, 4
        %v390 = vsel %vm157, %v389, %v388
        %v391 = vrot.slane %v356, 3
        %v392 = vsel %vm160, %v391, %v390
        %v393 = vrot.slane %v357, 2
        %v394 = vsel %vm163, %v393, %v392
        %v395 = vrot.slane %v358, 1
        %v396 = vsel %vm166, %v395, %v394
        %v397 = vrot.slane %v360, 7
        %v398 = vsel %vm148, %v397, %v359
        %v399 = vrot.slane %v361, 6
        %v400 = vsel %vm151, %v399, %v398
        %v401 = vrot.slane %v362, 5
        %v402 = vsel %vm154, %v401, %v400
        %v403 = vrot.slane %v363, 4
        %v404 = vsel %vm157, %v403, %v402
        %v405 = vrot.slane %v364, 3
        %v406 = vsel %vm160, %v405, %v404
        %v407 = vrot.slane %v365, 2
        %v408 = vsel %vm163, %v407, %v406
        %v409 = vrot.slane %v366, 1
        %v410 = vsel %vm166, %v409, %v408
        %v411 = vsel %vm182, %v396, 0
        %v413 = vsel %vm182, %v410, 0
        %415 = vmatpush.xpose.msra.mxu0 0.0
        %416 = vmatpush.xpose.msra.mxu0 0.0
        %417 = vmatpush.xpose.msra.mxu0 0.0
        %418 = vmatpush.xpose.msra.mxu0 0.0
        %419 = vmatpush.xpose.msra.mxu0 0.0
        %420 = vmatpush.xpose.msra.mxu0 0.0
        %421 = vmatpush.xpose.msra.mxu0 0.0
        %422 = vmatpush.xpose.msra.mxu0 0.0
        %423 = vmatpush.xpose.msra.mxu0 0.0
        %424 = vmatpush.xpose.msra.mxu0 0.0
        %425 = vmatpush.xpose.msra.mxu0 0.0
        %426 = vmatpush.xpose.msra.mxu0 0.0
        %427 = vmatpush.xpose.msra.mxu0 0.0
        %428 = vmatpush.xpose.msra.mxu0 0.0
        %429 = vmatpush.xpose.msra.mxu0 %v413
        %430 = vmatpush.xpose.msra.mxu0 %v411
        %431 = vmatmul.f32.gmra.mxu0 %v411
        %v432 = vpop.f32.mrf.mxu0
        %v433 = vadd.f32 0.0, %v432
        %434 = vmatmul.f32.gmra.mxu0 %v413
        %v435 = vpop.f32.mrf.mxu0
        %v436 = vadd.f32 0.0, %v435
        %437 = vdwg.mxu0
        %v438 = vmul.f32 %v433, 0.5
        %v439 = vmul.f32 %v436, 0.5
        %v440 = vsel %vm212, %v438, -inf
        %441 = vmax.xlane.f32.xlu0 %v440
        %v442 = vpop.xlane.xlu0 %441
        %v443 = vsel %vm212, %v439, -inf
        %444 = vmax.xlane.f32.xlu0 %v443
        %v445 = vpop.xlane.xlu0 %444
        %v446 = vsub.f32 %v438, %v442
        %v447 = vsub.f32 %v439, %v445
        %v448 = vmul.f32 %v446, 1.442695
        %v449 = vpow.pop %v448
        %v450 = vmul.f32 %v447, 1.442695
        %v451 = vpow.pop %v450
        %v452 = vsel %vm212, %v449, 0.0
        %453 = vadd.xlane.f32.xlu0 %v452
        %v454 = vpop.xlane.xlu0 %453
        %v455 = vsel %vm212, %v451, 0.0
        %456 = vadd.xlane.f32.xlu0 %v455
        %v457 = vpop.xlane.xlu0 %456
        %v458 = vrcp.pop %v454
        %v459 = vrcp.pop %v457
        %v460 = vmul.f32 %v449, %v458
        %v461 = vmul.f32 %v451, %v459
        %s462 = scalar_lea.vmem %s109, 32 [#allocation2]
        %463 = vst.msk [vmem:[%s462] sm:$0xff] %vm212, %v460
        %464 = vst.msk [vmem:[%s462 + $0x8] sm:$0xff] %vm212, %v461
        %v465 = vld [vmem:[%s114 + $0x3] sm:$0x1]
        %v466 = vld [vmem:[%s114 + $0xb] sm:$0x1]
        %v467 = vld [vmem:[%s114 + $0x13] sm:$0x1]
        %v468 = vld [vmem:[%s114 + $0x1b] sm:$0x1]
        %v469 = vld [vmem:[%s114 + $0x23] sm:$0x1]
        %v470 = vld [vmem:[%s114 + $0x2b] sm:$0x1]
        %v471 = vld [vmem:[%s114 + $0x33] sm:$0x1]
        %v472 = vld [vmem:[%s114 + $0x3b] sm:$0x1]
        %v473 = vld [vmem:[%s114 + $0x43] sm:$0x1]
        %v474 = vld [vmem:[%s114 + $0x4b] sm:$0x1]
        %v475 = vld [vmem:[%s114 + $0x53] sm:$0x1]
        %v476 = vld [vmem:[%s114 + $0x5b] sm:$0x1]
        %v477 = vld [vmem:[%s114 + $0x63] sm:$0x1]
        %v478 = vld [vmem:[%s114 + $0x6b] sm:$0x1]
        %v479 = vld [vmem:[%s114 + $0x73] sm:$0x1]
        %v480 = vld [vmem:[%s114 + $0x7b] sm:$0x1]
        %v497 = vrot.slane %v466, 7
        %v498 = vsel %vm148, %v497, %v465
        %v499 = vrot.slane %v467, 6
        %v500 = vsel %vm151, %v499, %v498
        %v501 = vrot.slane %v468, 5
        %v502 = vsel %vm154, %v501, %v500
        %v503 = vrot.slane %v469, 4
        %v504 = vsel %vm157, %v503, %v502
        %v505 = vrot.slane %v470, 3
        %v506 = vsel %vm160, %v505, %v504
        %v507 = vrot.slane %v471, 2
        %v508 = vsel %vm163, %v507, %v506
        %v509 = vrot.slane %v472, 1
        %v510 = vsel %vm166, %v509, %v508
        %v511 = vrot.slane %v474, 7
        %v512 = vsel %vm148, %v511, %v473
        %v513 = vrot.slane %v475, 6
        %v514 = vsel %vm151, %v513, %v512
        %v515 = vrot.slane %v476, 5
        %v516 = vsel %vm154, %v515, %v514
        %v517 = vrot.slane %v477, 4
        %v518 = vsel %vm157, %v517, %v516
        %v519 = vrot.slane %v478, 3
        %v520 = vsel %vm160, %v519, %v518
        %v521 = vrot.slane %v479, 2
        %v522 = vsel %vm163, %v521, %v520
        %v523 = vrot.slane %v480, 1
        %v524 = vsel %vm166, %v523, %v522
        %v525 = vsel %vm182, %v510, 0
        %v527 = vsel %vm182, %v524, 0
        %529 = vmatpush.xpose.msra.mxu0 0.0
        %530 = vmatpush.xpose.msra.mxu0 0.0
        %531 = vmatpush.xpose.msra.mxu0 0.0
        %532 = vmatpush.xpose.msra.mxu0 0.0
        %533 = vmatpush.xpose.msra.mxu0 0.0
        %534 = vmatpush.xpose.msra.mxu0 0.0
        %535 = vmatpush.xpose.msra.mxu0 0.0
        %536 = vmatpush.xpose.msra.mxu0 0.0
        %537 = vmatpush.xpose.msra.mxu0 0.0
        %538 = vmatpush.xpose.msra.mxu0 0.0
        %539 = vmatpush.xpose.msra.mxu0 0.0
        %540 = vmatpush.xpose.msra.mxu0 0.0
        %541 = vmatpush.xpose.msra.mxu0 0.0
        %542 = vmatpush.xpose.msra.mxu0 0.0
        %543 = vmatpush.xpose.msra.mxu0 %v527
        %544 = vmatpush.xpose.msra.mxu0 %v525
        %545 = vmatmul.f32.gmra.mxu0 %v525
        %v546 = vpop.f32.mrf.mxu0
        %v547 = vadd.f32 0.0, %v546
        %548 = vmatmul.f32.gmra.mxu0 %v527
        %v549 = vpop.f32.mrf.mxu0
        %v550 = vadd.f32 0.0, %v549
        %551 = vdwg.mxu0
        %v552 = vmul.f32 %v547, 0.5
        %v553 = vmul.f32 %v550, 0.5
        %v554 = vsel %vm212, %v552, -inf
        %555 = vmax.xlane.f32.xlu0 %v554
        %v556 = vpop.xlane.xlu0 %555
        %v557 = vsel %vm212, %v553, -inf
        %558 = vmax.xlane.f32.xlu0 %v557
        %v559 = vpop.xlane.xlu0 %558
        %v560 = vsub.f32 %v552, %v556
        %v561 = vsub.f32 %v553, %v559
        %v562 = vmul.f32 %v560, 1.442695
        %v563 = vpow.pop %v562
        %v564 = vmul.f32 %v561, 1.442695
        %v565 = vpow.pop %v564
        %v566 = vsel %vm212, %v563, 0.0
        %567 = vadd.xlane.f32.xlu0 %v566
        %v568 = vpop.xlane.xlu0 %567
        %v569 = vsel %vm212, %v565, 0.0
        %570 = vadd.xlane.f32.xlu0 %v569
        %v571 = vpop.xlane.xlu0 %570
        %v572 = vrcp.pop %v568
        %v573 = vrcp.pop %v571
        %v574 = vmul.f32 %v563, %v572
        %v575 = vmul.f32 %v565, %v573
        %s576 = scalar_lea.vmem %s109, 48 [#allocation2]
        %577 = vst.msk [vmem:[%s576] sm:$0xff] %vm212, %v574
        %578 = vst.msk [vmem:[%s576 + $0x8] sm:$0xff] %vm212, %v575
        %v579 = vld [vmem:[%s114 + $0x4] sm:$0x1]
        %v580 = vld [vmem:[%s114 + $0xc] sm:$0x1]
        %v581 = vld [vmem:[%s114 + $0x14] sm:$0x1]
        %v582 = vld [vmem:[%s114 + $0x1c] sm:$0x1]
        %v583 = vld [vmem:[%s114 + $0x24] sm:$0x1]
        %v584 = vld [vmem:[%s114 + $0x2c] sm:$0x1]
        %v585 = vld [vmem:[%s114 + $0x34] sm:$0x1]
        %v586 = vld [vmem:[%s114 + $0x3c] sm:$0x1]
        %v587 = vld [vmem:[%s114 + $0x44] sm:$0x1]
        %v588 = vld [vmem:[%s114 + $0x4c] sm:$0x1]
        %v589 = vld [vmem:[%s114 + $0x54] sm:$0x1]
        %v590 = vld [vmem:[%s114 + $0x5c] sm:$0x1]
        %v591 = vld [vmem:[%s114 + $0x64] sm:$0x1]
        %v592 = vld [vmem:[%s114 + $0x6c] sm:$0x1]
        %v593 = vld [vmem:[%s114 + $0x74] sm:$0x1]
        %v594 = vld [vmem:[%s114 + $0x7c] sm:$0x1]
        %v611 = vrot.slane %v580, 7
        %v612 = vsel %vm148, %v611, %v579
        %v613 = vrot.slane %v581, 6
        %v614 = vsel %vm151, %v613, %v612
        %v615 = vrot.slane %v582, 5
        %v616 = vsel %vm154, %v615, %v614
        %v617 = vrot.slane %v583, 4
        %v618 = vsel %vm157, %v617, %v616
        %v619 = vrot.slane %v584, 3
        %v620 = vsel %vm160, %v619, %v618
        %v621 = vrot.slane %v585, 2
        %v622 = vsel %vm163, %v621, %v620
        %v623 = vrot.slane %v586, 1
        %v624 = vsel %vm166, %v623, %v622
        %v625 = vrot.slane %v588, 7
        %v626 = vsel %vm148, %v625, %v587
        %v627 = vrot.slane %v589, 6
        %v628 = vsel %vm151, %v627, %v626
        %v629 = vrot.slane %v590, 5
        %v630 = vsel %vm154, %v629, %v628
        %v631 = vrot.slane %v591, 4
        %v632 = vsel %vm157, %v631, %v630
        %v633 = vrot.slane %v592, 3
        %v634 = vsel %vm160, %v633, %v632
        %v635 = vrot.slane %v593, 2
        %v636 = vsel %vm163, %v635, %v634
        %v637 = vrot.slane %v594, 1
        %v638 = vsel %vm166, %v637, %v636
        %v639 = vsel %vm182, %v624, 0
        %v641 = vsel %vm182, %v638, 0
        %643 = vmatpush.xpose.msra.mxu0 0.0
        %644 = vmatpush.xpose.msra.mxu0 0.0
        %645 = vmatpush.xpose.msra.mxu0 0.0
        %646 = vmatpush.xpose.msra.mxu0 0.0
        %647 = vmatpush.xpose.msra.mxu0 0.0
        %648 = vmatpush.xpose.msra.mxu0 0.0
        %649 = vmatpush.xpose.msra.mxu0 0.0
        %650 = vmatpush.xpose.msra.mxu0 0.0
        %651 = vmatpush.xpose.msra.mxu0 0.0
        %652 = vmatpush.xpose.msra.mxu0 0.0
        %653 = vmatpush.xpose.msra.mxu0 0.0
        %654 = vmatpush.xpose.msra.mxu0 0.0
        %655 = vmatpush.xpose.msra.mxu0 0.0
        %656 = vmatpush.xpose.msra.mxu0 0.0
        %657 = vmatpush.xpose.msra.mxu0 %v641
        %658 = vmatpush.xpose.msra.mxu0 %v639
        %659 = vmatmul.f32.gmra.mxu0 %v639
        %v660 = vpop.f32.mrf.mxu0
        %v661 = vadd.f32 0.0, %v660
        %662 = vmatmul.f32.gmra.mxu0 %v641
        %v663 = vpop.f32.mrf.mxu0
        %v664 = vadd.f32 0.0, %v663
        %665 = vdwg.mxu0
        %v666 = vmul.f32 %v661, 0.5
        %v667 = vmul.f32 %v664, 0.5
        %v668 = vsel %vm212, %v666, -inf
        %669 = vmax.xlane.f32.xlu0 %v668
        %v670 = vpop.xlane.xlu0 %669
        %v671 = vsel %vm212, %v667, -inf
        %672 = vmax.xlane.f32.xlu0 %v671
        %v673 = vpop.xlane.xlu0 %672
        %v674 = vsub.f32 %v666, %v670
        %v675 = vsub.f32 %v667, %v673
        %v676 = vmul.f32 %v674, 1.442695
        %v677 = vpow.pop %v676
        %v678 = vmul.f32 %v675, 1.442695
        %v679 = vpow.pop %v678
        %v680 = vsel %vm212, %v677, 0.0
        %681 = vadd.xlane.f32.xlu0 %v680
        %v682 = vpop.xlane.xlu0 %681
        %v683 = vsel %vm212, %v679, 0.0
        %684 = vadd.xlane.f32.xlu0 %v683
        %v685 = vpop.xlane.xlu0 %684
        %v686 = vrcp.pop %v682
        %v687 = vrcp.pop %v685
        %v688 = vmul.f32 %v677, %v686
        %v689 = vmul.f32 %v679, %v687
        %s690 = scalar_lea.vmem %s109, 64 [#allocation2]
        %691 = vst.msk [vmem:[%s690] sm:$0xff] %vm212, %v688
        %692 = vst.msk [vmem:[%s690 + $0x8] sm:$0xff] %vm212, %v689
        %v693 = vld [vmem:[%s114 + $0x5] sm:$0x1]
        %v694 = vld [vmem:[%s114 + $0xd] sm:$0x1]
        %v695 = vld [vmem:[%s114 + $0x15] sm:$0x1]
        %v696 = vld [vmem:[%s114 + $0x1d] sm:$0x1]
        %v697 = vld [vmem:[%s114 + $0x25] sm:$0x1]
        %v698 = vld [vmem:[%s114 + $0x2d] sm:$0x1]
        %v699 = vld [vmem:[%s114 + $0x35] sm:$0x1]
        %v700 = vld [vmem:[%s114 + $0x3d] sm:$0x1]
        %v701 = vld [vmem:[%s114 + $0x45] sm:$0x1]
        %v702 = vld [vmem:[%s114 + $0x4d] sm:$0x1]
        %v703 = vld [vmem:[%s114 + $0x55] sm:$0x1]
        %v704 = vld [vmem:[%s114 + $0x5d] sm:$0x1]
        %v705 = vld [vmem:[%s114 + $0x65] sm:$0x1]
        %v706 = vld [vmem:[%s114 + $0x6d] sm:$0x1]
        %v707 = vld [vmem:[%s114 + $0x75] sm:$0x1]
        %v708 = vld [vmem:[%s114 + $0x7d] sm:$0x1]
        %v725 = vrot.slane %v694, 7
        %v726 = vsel %vm148, %v725, %v693
        %v727 = vrot.slane %v695, 6
        %v728 = vsel %vm151, %v727, %v726
        %v729 = vrot.slane %v696, 5
        %v730 = vsel %vm154, %v729, %v728
        %v731 = vrot.slane %v697, 4
        %v732 = vsel %vm157, %v731, %v730
        %v733 = vrot.slane %v698, 3
        %v734 = vsel %vm160, %v733, %v732
        %v735 = vrot.slane %v699, 2
        %v736 = vsel %vm163, %v735, %v734
        %v737 = vrot.slane %v700, 1
        %v738 = vsel %vm166, %v737, %v736
        %v739 = vrot.slane %v702, 7
        %v740 = vsel %vm148, %v739, %v701
        %v741 = vrot.slane %v703, 6
        %v742 = vsel %vm151, %v741, %v740
        %v743 = vrot.slane %v704, 5
        %v744 = vsel %vm154, %v743, %v742
        %v745 = vrot.slane %v705, 4
        %v746 = vsel %vm157, %v745, %v744
        %v747 = vrot.slane %v706, 3
        %v748 = vsel %vm160, %v747, %v746
        %v749 = vrot.slane %v707, 2
        %v750 = vsel %vm163, %v749, %v748
        %v751 = vrot.slane %v708, 1
        %v752 = vsel %vm166, %v751, %v750
        %v753 = vsel %vm182, %v738, 0
        %v755 = vsel %vm182, %v752, 0
        %757 = vmatpush.xpose.msra.mxu0 0.0
        %758 = vmatpush.xpose.msra.mxu0 0.0
        %759 = vmatpush.xpose.msra.mxu0 0.0
        %760 = vmatpush.xpose.msra.mxu0 0.0
        %761 = vmatpush.xpose.msra.mxu0 0.0
        %762 = vmatpush.xpose.msra.mxu0 0.0
        %763 = vmatpush.xpose.msra.mxu0 0.0
        %764 = vmatpush.xpose.msra.mxu0 0.0
        %765 = vmatpush.xpose.msra.mxu0 0.0
        %766 = vmatpush.xpose.msra.mxu0 0.0
        %767 = vmatpush.xpose.msra.mxu0 0.0
        %768 = vmatpush.xpose.msra.mxu0 0.0
        %769 = vmatpush.xpose.msra.mxu0 0.0
        %770 = vmatpush.xpose.msra.mxu0 0.0
        %771 = vmatpush.xpose.msra.mxu0 %v755
        %772 = vmatpush.xpose.msra.mxu0 %v753
        %773 = vmatmul.f32.gmra.mxu0 %v753
        %v774 = vpop.f32.mrf.mxu0
        %v775 = vadd.f32 0.0, %v774
        %776 = vmatmul.f32.gmra.mxu0 %v755
        %v777 = vpop.f32.mrf.mxu0
        %v778 = vadd.f32 0.0, %v777
        %779 = vdwg.mxu0
        %v780 = vmul.f32 %v775, 0.5
        %v781 = vmul.f32 %v778, 0.5
        %v782 = vsel %vm212, %v780, -inf
        %783 = vmax.xlane.f32.xlu0 %v782
        %v784 = vpop.xlane.xlu0 %783
        %v785 = vsel %vm212, %v781, -inf
        %786 = vmax.xlane.f32.xlu0 %v785
        %v787 = vpop.xlane.xlu0 %786
        %v788 = vsub.f32 %v780, %v784
        %v789 = vsub.f32 %v781, %v787
        %v790 = vmul.f32 %v788, 1.442695
        %v791 = vpow.pop %v790
        %v792 = vmul.f32 %v789, 1.442695
        %v793 = vpow.pop %v792
        %v794 = vsel %vm212, %v791, 0.0
        %795 = vadd.xlane.f32.xlu0 %v794
        %v796 = vpop.xlane.xlu0 %795
        %v797 = vsel %vm212, %v793, 0.0
        %798 = vadd.xlane.f32.xlu0 %v797
        %v799 = vpop.xlane.xlu0 %798
        %v800 = vrcp.pop %v796
        %v801 = vrcp.pop %v799
        %v802 = vmul.f32 %v791, %v800
        %v803 = vmul.f32 %v793, %v801
        %s804 = scalar_lea.vmem %s109, 80 [#allocation2]
        %805 = vst.msk [vmem:[%s804] sm:$0xff] %vm212, %v802
        %806 = vst.msk [vmem:[%s804 + $0x8] sm:$0xff] %vm212, %v803
        %v807 = vld [vmem:[%s114 + $0x6] sm:$0x1]
        %v808 = vld [vmem:[%s114 + $0xe] sm:$0x1]
        %v809 = vld [vmem:[%s114 + $0x16] sm:$0x1]
        %v810 = vld [vmem:[%s114 + $0x1e] sm:$0x1]
        %v811 = vld [vmem:[%s114 + $0x26] sm:$0x1]
        %v812 = vld [vmem:[%s114 + $0x2e] sm:$0x1]
        %v813 = vld [vmem:[%s114 + $0x36] sm:$0x1]
        %v814 = vld [vmem:[%s114 + $0x3e] sm:$0x1]
        %v815 = vld [vmem:[%s114 + $0x46] sm:$0x1]
        %v816 = vld [vmem:[%s114 + $0x4e] sm:$0x1]
        %v817 = vld [vmem:[%s114 + $0x56] sm:$0x1]
        %v818 = vld [vmem:[%s114 + $0x5e] sm:$0x1]
        %v819 = vld [vmem:[%s114 + $0x66] sm:$0x1]
        %v820 = vld [vmem:[%s114 + $0x6e] sm:$0x1]
        %v821 = vld [vmem:[%s114 + $0x76] sm:$0x1]
        %v822 = vld [vmem:[%s114 + $0x7e] sm:$0x1]
        %v839 = vrot.slane %v808, 7
        %v840 = vsel %vm148, %v839, %v807
        %v841 = vrot.slane %v809, 6
        %v842 = vsel %vm151, %v841, %v840
        %v843 = vrot.slane %v810, 5
        %v844 = vsel %vm154, %v843, %v842
        %v845 = vrot.slane %v811, 4
        %v846 = vsel %vm157, %v845, %v844
        %v847 = vrot.slane %v812, 3
        %v848 = vsel %vm160, %v847, %v846
        %v849 = vrot.slane %v813, 2
        %v850 = vsel %vm163, %v849, %v848
        %v851 = vrot.slane %v814, 1
        %v852 = vsel %vm166, %v851, %v850
        %v853 = vrot.slane %v816, 7
        %v854 = vsel %vm148, %v853, %v815
        %v855 = vrot.slane %v817, 6
        %v856 = vsel %vm151, %v855, %v854
        %v857 = vrot.slane %v818, 5
        %v858 = vsel %vm154, %v857, %v856
        %v859 = vrot.slane %v819, 4
        %v860 = vsel %vm157, %v859, %v858
        %v861 = vrot.slane %v820, 3
        %v862 = vsel %vm160, %v861, %v860
        %v863 = vrot.slane %v821, 2
        %v864 = vsel %vm163, %v863, %v862
        %v865 = vrot.slane %v822, 1
        %v866 = vsel %vm166, %v865, %v864
        %v867 = vsel %vm182, %v852, 0
        %v869 = vsel %vm182, %v866, 0
        %871 = vmatpush.xpose.msra.mxu0 0.0
        %872 = vmatpush.xpose.msra.mxu0 0.0
        %873 = vmatpush.xpose.msra.mxu0 0.0
        %874 = vmatpush.xpose.msra.mxu0 0.0
        %875 = vmatpush.xpose.msra.mxu0 0.0
        %876 = vmatpush.xpose.msra.mxu0 0.0
        %877 = vmatpush.xpose.msra.mxu0 0.0
        %878 = vmatpush.xpose.msra.mxu0 0.0
        %879 = vmatpush.xpose.msra.mxu0 0.0
        %880 = vmatpush.xpose.msra.mxu0 0.0
        %881 = vmatpush.xpose.msra.mxu0 0.0
        %882 = vmatpush.xpose.msra.mxu0 0.0
        %883 = vmatpush.xpose.msra.mxu0 0.0
        %884 = vmatpush.xpose.msra.mxu0 0.0
        %885 = vmatpush.xpose.msra.mxu0 %v869
        %886 = vmatpush.xpose.msra.mxu0 %v867
        %887 = vmatmul.f32.gmra.mxu0 %v867
        %v888 = vpop.f32.mrf.mxu0
        %v889 = vadd.f32 0.0, %v888
        %890 = vmatmul.f32.gmra.mxu0 %v869
        %v891 = vpop.f32.mrf.mxu0
        %v892 = vadd.f32 0.0, %v891
        %893 = vdwg.mxu0
        %v894 = vmul.f32 %v889, 0.5
        %v895 = vmul.f32 %v892, 0.5
        %v896 = vsel %vm212, %v894, -inf
        %897 = vmax.xlane.f32.xlu0 %v896
        %v898 = vpop.xlane.xlu0 %897
        %v899 = vsel %vm212, %v895, -inf
        %900 = vmax.xlane.f32.xlu0 %v899
        %v901 = vpop.xlane.xlu0 %900
        %v902 = vsub.f32 %v894, %v898
        %v903 = vsub.f32 %v895, %v901
        %v904 = vmul.f32 %v902, 1.442695
        %v905 = vpow.pop %v904
        %v906 = vmul.f32 %v903, 1.442695
        %v907 = vpow.pop %v906
        %v908 = vsel %vm212, %v905, 0.0
        %909 = vadd.xlane.f32.xlu0 %v908
        %v910 = vpop.xlane.xlu0 %909
        %v911 = vsel %vm212, %v907, 0.0
        %912 = vadd.xlane.f32.xlu0 %v911
        %v913 = vpop.xlane.xlu0 %912
        %v914 = vrcp.pop %v910
        %v915 = vrcp.pop %v913
        %v916 = vmul.f32 %v905, %v914
        %v917 = vmul.f32 %v907, %v915
        %s918 = scalar_lea.vmem %s109, 96 [#allocation2]
        %919 = vst.msk [vmem:[%s918] sm:$0xff] %vm212, %v916
        %920 = vst.msk [vmem:[%s918 + $0x8] sm:$0xff] %vm212, %v917
        %v921 = vld [vmem:[%s114 + $0x7] sm:$0x1]
        %v922 = vld [vmem:[%s114 + $0xf] sm:$0x1]
        %v923 = vld [vmem:[%s114 + $0x17] sm:$0x1]
        %v924 = vld [vmem:[%s114 + $0x1f] sm:$0x1]
        %v925 = vld [vmem:[%s114 + $0x27] sm:$0x1]
        %v926 = vld [vmem:[%s114 + $0x2f] sm:$0x1]
        %v927 = vld [vmem:[%s114 + $0x37] sm:$0x1]
        %v928 = vld [vmem:[%s114 + $0x3f] sm:$0x1]
        %v929 = vld [vmem:[%s114 + $0x47] sm:$0x1]
        %v930 = vld [vmem:[%s114 + $0x4f] sm:$0x1]
        %v931 = vld [vmem:[%s114 + $0x57] sm:$0x1]
        %v932 = vld [vmem:[%s114 + $0x5f] sm:$0x1]
        %v933 = vld [vmem:[%s114 + $0x67] sm:$0x1]
        %v934 = vld [vmem:[%s114 + $0x6f] sm:$0x1]
        %v935 = vld [vmem:[%s114 + $0x77] sm:$0x1]
        %v936 = vld [vmem:[%s114 + $0x7f] sm:$0x1]
        %v953 = vrot.slane %v922, 7
        %v954 = vsel %vm148, %v953, %v921
        %v955 = vrot.slane %v923, 6
        %v956 = vsel %vm151, %v955, %v954
        %v957 = vrot.slane %v924, 5
        %v958 = vsel %vm154, %v957, %v956
        %v959 = vrot.slane %v925, 4
        %v960 = vsel %vm157, %v959, %v958
        %v961 = vrot.slane %v926, 3
        %v962 = vsel %vm160, %v961, %v960
        %v963 = vrot.slane %v927, 2
        %v964 = vsel %vm163, %v963, %v962
        %v965 = vrot.slane %v928, 1
        %v966 = vsel %vm166, %v965, %v964
        %v967 = vrot.slane %v930, 7
        %v968 = vsel %vm148, %v967, %v929
        %v969 = vrot.slane %v931, 6
        %v970 = vsel %vm151, %v969, %v968
        %v971 = vrot.slane %v932, 5
        %v972 = vsel %vm154, %v971, %v970
        %v973 = vrot.slane %v933, 4
        %v974 = vsel %vm157, %v973, %v972
        %v975 = vrot.slane %v934, 3
        %v976 = vsel %vm160, %v975, %v974
        %v977 = vrot.slane %v935, 2
        %v978 = vsel %vm163, %v977, %v976
        %v979 = vrot.slane %v936, 1
        %v980 = vsel %vm166, %v979, %v978
        %v981 = vsel %vm182, %v966, 0
        %v983 = vsel %vm182, %v980, 0
        %985 = vmatpush.xpose.msra.mxu0 0.0
        %986 = vmatpush.xpose.msra.mxu0 0.0
        %987 = vmatpush.xpose.msra.mxu0 0.0
        %988 = vmatpush.xpose.msra.mxu0 0.0
        %989 = vmatpush.xpose.msra.mxu0 0.0
        %990 = vmatpush.xpose.msra.mxu0 0.0
        %991 = vmatpush.xpose.msra.mxu0 0.0
        %992 = vmatpush.xpose.msra.mxu0 0.0
        %993 = vmatpush.xpose.msra.mxu0 0.0
        %994 = vmatpush.xpose.msra.mxu0 0.0
        %995 = vmatpush.xpose.msra.mxu0 0.0
        %996 = vmatpush.xpose.msra.mxu0 0.0
        %997 = vmatpush.xpose.msra.mxu0 0.0
        %998 = vmatpush.xpose.msra.mxu0 0.0
        %999 = vmatpush.xpose.msra.mxu0 %v983
        %1000 = vmatpush.xpose.msra.mxu0 %v981
        %1001 = vmatmul.f32.gmra.mxu0 %v981
        %v1002 = vpop.f32.mrf.mxu0
        %v1003 = vadd.f32 0.0, %v1002
        %1004 = vmatmul.f32.gmra.mxu0 %v983
        %v1005 = vpop.f32.mrf.mxu0
        %v1006 = vadd.f32 0.0, %v1005
        %1007 = vdwg.mxu0
        %v1008 = vmul.f32 %v1003, 0.5
        %v1009 = vmul.f32 %v1006, 0.5
        %v1010 = vsel %vm212, %v1008, -inf
        %1011 = vmax.xlane.f32.xlu0 %v1010
        %v1012 = vpop.xlane.xlu0 %1011
        %v1013 = vsel %vm212, %v1009, -inf
        %1014 = vmax.xlane.f32.xlu0 %v1013
        %v1015 = vpop.xlane.xlu0 %1014
        %v1016 = vsub.f32 %v1008, %v1012
        %v1017 = vsub.f32 %v1009, %v1015
        %v1018 = vmul.f32 %v1016, 1.442695
        %v1019 = vpow.pop %v1018
        %v1020 = vmul.f32 %v1017, 1.442695
        %v1021 = vpow.pop %v1020
        %v1022 = vsel %vm212, %v1019, 0.0
        %1023 = vadd.xlane.f32.xlu0 %v1022
        %v1024 = vpop.xlane.xlu0 %1023
        %v1025 = vsel %vm212, %v1021, 0.0
        %1026 = vadd.xlane.f32.xlu0 %v1025
        %v1027 = vpop.xlane.xlu0 %1026
        %v1028 = vrcp.pop %v1024
        %v1029 = vrcp.pop %v1027
        %v1030 = vmul.f32 %v1019, %v1028
        %v1031 = vmul.f32 %v1021, %v1029
        %s1032 = scalar_lea.vmem %s109, 112 [#allocation2]
        %1033 = vst.msk [vmem:[%s1032] sm:$0xff] %vm212, %v1030
        %1034 = vst.msk [vmem:[%s1032 + $0x8] sm:$0xff] %vm212, %v1031
        %s1035 = sand.u32 %s49, 1
        %s1036 = scalar_lea.sflag [#allocation3], %s1035
        %s1037 = sand.u32 %s49, 1
        %s1038 = smul.addr %s1037, 128
        %s1039 = scalar_lea.vmem [#allocation2], %s1038
        // Predicated region
        $region25: #{tpu_custom_call.1} parent=23 // pred_check
          %p1040 = pneg %p59
        $region26: #{tpu_custom_call.1} parent=23 // pred_check_branch
          %1042 = sbr.rel (%p1040) target = $region28
        $region27: #{tpu_custom_call.1} parent=23 // pred_region
          %1044 = vsyncadd %s1036, 0
          %s1045 = smul.addr %s15, 16
          %s1046 = smul.addr %s1045, 8
          %s1047 = scalar_lea.hbm %s1, %s1046
          %s1048 = sshll.u32 %s1039, 4
          %s1049 = int_to_ptr.vmem [resolvable:$true] %s1048
          %s1050 = sshll.u32 %s1047, 4
          %s1051 = int_to_ptr.hbm [resolvable:$true] %s1050
          %1056 = dma.vmem_to_hbm [thread:$0]  %s1049, 2048, %s1051, %s1036, 128, 128, 8
        $region28: #{tpu_custom_call.1} parent=23 // pred_fallthru
          _
      $region24: #{tpu_custom_call.1} parent=5 // pred_fallthru
        _
      %p1057 = scmp.le.s32.totalorder 2, %s10
      // Predicated region
      $region29: #{tpu_custom_call.1} parent=5 // pred_check
        %p1058 = pneg %p1057
      $region30: #{tpu_custom_call.1} parent=5 // pred_check_branch
        %1060 = sbr.rel (%p1058) target = $region32
      $region31: #{tpu_custom_call.1} parent=5 // pred_region
        %s1061 = ssub.s32 %s10, 2
        // Predicated region
        $region33: #{tpu_custom_call.1} parent=31 // pred_check
          %p1062 = pneg %p65
        $region34: #{tpu_custom_call.1} parent=31 // pred_check_branch
          %1064 = sbr.rel (%p1062) target = $region36
        $region35: #{tpu_custom_call.1} parent=31 // pred_region
          %s1065 = sand.u32 %s50, 1
          %s1066 = scalar_lea.sflag [#allocation3], %s1065
          %s1067 = sand.u32 %s50, 1
          %s1068 = smul.addr %s1067, 128
          %s1069 = scalar_lea.vmem [#allocation2], %s1068
          %1071 = dma.done %s1066, 2048
        $region36: #{tpu_custom_call.1} parent=31 // pred_fallthru
          _
      $region32: #{tpu_custom_call.1} parent=5 // pred_fallthru
        _
    $region6: #{tpu_custom_call.1} parent=1 // loop_footer
      %s14 = sadd.s32 1, %s10
    $region7: #{tpu_custom_call.1} parent=1 // loop_footer_branch
      %9 = sbr.rel target = $region3
    $region8: #{tpu_custom_call.1} parent=1 // loop_exit
      _
    %1072 = vsyncpa [#allocation3], 1
    %s1073 = scalar_lea.sflag [#allocation3], 1
    %1074 = vsyncpa %s1073, 1

</llo_original>
